<compile_context>
chip_gen: v7x
topology: tpu7x:2x2x1
jax: 0.10.0
libtpu: 0.0.40
codegen_flags: <defaults>
</compile_context>

<pallas_src>
import functools

import jax
import jax.numpy as jnp
from jax.experimental import pallas as pl
from jax.experimental.pallas import tpu as pltpu


# Set to jnp.bfloat16 for inference on v6e/v7x (2x MXU throughput, half the
# HBM/VMEM bytes per tile).  Accumulation and the bias+ReLU epilogue stay f32
# either way (v5e has no bf16 VPU).  f32 default keeps the strict ref check.
COMPUTE_DTYPE = jnp.float32

# Base tile sizes, sized against v7x's 64 MiB physical / 32 MiB scoped VMEM
# (double-buffered f32 tiles stay a few MiB) and MXU-friendly on all
# generations (tm/tn multiples of 128 when the problem is big enough,
# tk >= 256).  They are clamped to the (8,128)-rounded problem size below.
_TM, _TN, _TK = 256, 256, 512
_VMEM_LIMIT_BYTES = 32 * 1024 * 1024


def _round_up(x, m):
    return (x + m - 1) // m * m


# ----------------------------------------------------------------------------
# Pallas kernel: tiled matmul + bias + ReLU with K-axis accumulation
# ----------------------------------------------------------------------------
def _matmul_bias_relu_kernel(x_ref, w_ref, b_ref, o_ref, acc_ref):
    @pl.when(pl.program_id(2) == 0)
    def _():
        acc_ref[...] = jnp.zeros_like(acc_ref)

    acc_ref[...] += jnp.dot(x_ref[...], w_ref[...],
                            preferred_element_type=jnp.float32)

    @pl.when(pl.program_id(2) == pl.num_programs(2) - 1)
    def _():
        acc = acc_ref[...] + b_ref[...]          # f32 epilogue, bias broadcast
        o_ref[...] = jnp.maximum(acc, 0.0).astype(o_ref.dtype)


def matmul_bias_relu(x, w, b):
    """x: (M, K), w: (K, N), b: (N,)  ->  relu(x @ w + b) : (M, N) float32."""
    M, K = x.shape
    K2, N = w.shape
    assert K == K2

    # Clamp tiles to the padded problem; keep (8, 128) alignment so every
    # load/store is unmasked and the output lane dim is dense.
    tm = min(_TM, _round_up(M, 8))
    tn = min(_TN, _round_up(N, 128))
    tk = min(_TK, _round_up(K, 128))
    Mp, Np, Kp = _round_up(M, tm), _round_up(N, tn), _round_up(K, tk)

    xp = x.astype(COMPUTE_DTYPE)
    wp = w.astype(COMPUTE_DTYPE)
    if (Mp, Kp) != (M, K):
        xp = jnp.pad(xp, ((0, Mp - M), (0, Kp - K)))
    if (Kp, Np) != (K, N):
        wp = jnp.pad(wp, ((0, Kp - K), (0, Np - N)))
    bp = b.astype(jnp.float32)
    if Np != N:
        bp = jnp.pad(bp, (0, Np - N))
    bp = bp.reshape(1, Np)

    grid = (Mp // tm, Np // tn, Kp // tk)
    out = pl.pallas_call(
        _matmul_bias_relu_kernel,
        out_shape=jax.ShapeDtypeStruct((Mp, Np), jnp.float32),
        grid_spec=pltpu.PrefetchScalarGridSpec(
            num_scalar_prefetch=0,
            grid=grid,
            in_specs=[
                pl.BlockSpec((tm, tk), lambda i, j, kk: (i, kk)),
                pl.BlockSpec((tk, tn), lambda i, j, kk: (kk, j)),
                pl.BlockSpec((1, tn), lambda i, j, kk: (0, j)),
            ],
            out_specs=pl.BlockSpec((tm, tn), lambda i, j, kk: (i, j)),
            scratch_shapes=[pltpu.VMEM((tm, tn), jnp.float32)],
        ),
        compiler_params=pltpu.CompilerParams(
            dimension_semantics=("parallel", "parallel", "arbitrary"),
            vmem_limit_bytes=_VMEM_LIMIT_BYTES,
        ),
        cost_estimate=pl.CostEstimate(
            flops=2 * Mp * Np * Kp,
            transcendentals=0,
            bytes_accessed=(Mp * Kp + Kp * Np) * xp.dtype.itemsize + Mp * Np * 4,
        ),
    )(xp, wp, bp)

    if (Mp, Np) != (M, N):
        out = out[:M, :N]
    return out


# ----------------------------------------------------------------------------
# Conv2d(valid, stride) + ReLU: NHWC im2col + Pallas matmul kernel
# ----------------------------------------------------------------------------
def conv2d_relu_nhwc(x, wmat, b, k, stride):
    """x: (N, H, W, Cin) NHWC; wmat: (k*k*Cin, Cout) with (kh, kw, cin) row
    order; b: (Cout,).  Valid padding.  Returns NHWC (N, Hout, Wout, Cout)."""
    n, h, w_, cin = x.shape
    cout = wmat.shape[1]
    hout = (h - k) // stride + 1
    wout = (w_ - k) // stride + 1

    # im2col glue (no layout transposes in NHWC; fused by the enclosing jit).
    # TODO(synk): fuse the im2col gather into the Pallas kernel (e.g. a
    # (kh,kw) grid axis / in-VMEM tap gather) to drop the k*k-expanded
    # intermediate and its HBM round trip.
    cols = []
    for kh in range(k):
        for kw in range(k):
            sl = jax.lax.slice(
                x,
                (0, kh, kw, 0),
                (n, kh + stride * (hout - 1) + 1,
                 kw + stride * (wout - 1) + 1, cin),
                (1, stride, stride, 1),
            )  # (N, Hout, Wout, Cin)
            cols.append(sl)
    p = jnp.stack(cols, axis=3)                     # (N, Hout, Wout, k*k, Cin)
    p = p.reshape(n * hout * wout, k * k * cin)

    y = matmul_bias_relu(p, wmat, b)                # (N*Hout*Wout, Cout)
    return y.reshape(n, hout, wout, cout)           # stays NHWC


# ----------------------------------------------------------------------------
# whole forward (jitted once: pallas_calls + glue compile into one program)
# ----------------------------------------------------------------------------
def _forward(params, x, *, k, stride):
    # module boundary: NCHW in (PyTorch convention) -> NHWC internally.
    x = jnp.transpose(x, (0, 2, 3, 1))
    for (wmat, b) in params["conv"]:
        x = conv2d_relu_nhwc(x, wmat, b, k, stride)
    if params["lin"]:
        # single boundary transpose so the flatten matches PyTorch's
        # NCHW .view(N, -1) feature order.
        x = jnp.transpose(x, (0, 3, 1, 2)).reshape(x.shape[0], -1)
        for (wmat, b) in params["lin"]:
            x = matmul_bias_relu(x, wmat, b)
            # TODO(synk): training-mode dropout (mask + 1/(1-p) scale) not
            # implemented; eval-mode identity is used.
    return x


# ----------------------------------------------------------------------------
# ConvNet (mirrors the PyTorch module's __init__ / forward semantics)
# ----------------------------------------------------------------------------
class ConvNetPallas:
    def __init__(self, sizes, n_convs, dropout_p, k, stride, key):
        self.k = k
        self.stride = stride
        self.dropout_p = dropout_p  # eval-mode dropout == identity

        conv_sizes = sizes[1:n_convs + 1]
        lin_sizes = sizes[n_convs + 1:]
        first_layer_dims = sizes[0]
        assert len(first_layer_dims) == 3
        img_size = list(first_layer_dims[1:])
        last_n_filters = first_layer_dims[0]

        self.conv_params_ref = []   # PyTorch-layout (OIHW) for the ref check
        conv_params = []            # pre-reshaped (k*k*Cin, Cout) for Pallas
        for size in conv_sizes:
            if not isinstance(size, int):
                assert len(size) == 3
                size = size[0]
            key, k1, k2 = jax.random.split(key, 3)
            fan_in = last_n_filters * k * k
            bound = 1.0 / (fan_in ** 0.5)
            w = jax.random.uniform(k1, (size, last_n_filters, k, k),
                                   jnp.float32, -bound, bound)
            b = jax.random.uniform(k2, (size,), jnp.float32, -bound, bound)
            self.conv_params_ref.append((w, b))
            # (Cout,Cin,kh,kw) -> (kh,kw,Cin,Cout) -> (k*k*Cin, Cout):
            # matches the NHWC im2col column order (kh, kw, cin).
            wmat = w.transpose(2, 3, 1, 0).reshape(k * k * last_n_filters, size)
            conv_params.append((wmat, b))
            # mirrors the PyTorch module's img_size bookkeeping exactly
            img_size = [(s - (k - 1) + 1) // stride for s in img_size]
            last_n_filters = size

        n_features = last_n_filters * img_size[0] * img_size[1]

        self.lin_params_ref = []    # PyTorch-layout (out, in) for the ref check
        lin_params = []             # pre-transposed (in, out) for Pallas
        last_size = n_features
        for size in lin_sizes:
            key, k1, k2 = jax.random.split(key, 3)
            bound = 1.0 / (last_size ** 0.5)
            w = jax.random.uniform(k1, (size, last_size), jnp.float32,
                                   -bound, bound)
            b = jax.random.uniform(k2, (size,), jnp.float32, -bound, bound)
            self.lin_params_ref.append((w, b))
            lin_params.append((w.T, b))
            last_size = size

        self.params = {"conv": conv_params, "lin": lin_params}
        self._jit_forward = jax.jit(
            functools.partial(_forward, k=self.k, stride=self.stride))

    def __call__(self, x):
        return self._jit_forward(self.params, x)


# pure-JAX reference for a correctness sanity check
def ref_forward(model, x):
    for (w, b) in model.conv_params_ref:
        x = jax.lax.conv_general_dilated(
            x, w, (model.stride, model.stride), "VALID",
            dimension_numbers=("NCHW", "OIHW", "NCHW"))
        x = jnp.maximum(x + b[None, :, None, None], 0.0)
    if model.lin_params_ref:
        x = x.reshape(x.shape[0], -1)
        for (w, b) in model.lin_params_ref:
            x = jnp.maximum(x @ w.T + b, 0.0)
    return x


if __name__ == "__main__":
    key = jax.random.PRNGKey(0)
    key, pkey, xkey = jax.random.split(key, 3)

    # sizes[0] = (C, H, W) image dims; then 2 conv channel sizes, then 2 linear
    # sizes.  k=3, stride=2 keeps the module's img_size bookkeeping consistent
    # with the actual conv output shapes (as required for the PyTorch module).
    sizes = [(4, 16, 16), 8, 16, 32, 10]
    model = ConvNetPallas(sizes, n_convs=2, dropout_p=0.0, k=3, stride=2,
                          key=pkey)

    x = jax.random.normal(xkey, (2, 4, 16, 16), jnp.float32)

    out = jax.block_until_ready(model(x))
    expected = jax.block_until_ready(ref_forward(model, x))

    assert out.shape == (2, 10)
    assert jnp.allclose(out, expected, rtol=1e-4, atol=1e-4)

    print("KERNEL_OK")
</pallas_src>

<mosaic_0001>
module attributes {stable_mosaic.version = 11 : i64} {
  func.func @_matmul_bias_relu_kernel(%arg0: i32, %arg1: i32, %arg2: i32, %arg3: memref<104x128xf32, #tpu.memory_space<vmem>>, %arg4: memref<128x128xf32, #tpu.memory_space<vmem>>, %arg5: memref<1x128xf32, #tpu.memory_space<vmem>>, %arg6: memref<104x128xf32, #tpu.memory_space<vmem>>, %arg7: memref<104x128xf32, #tpu.memory_space<vmem>>) attributes {dimension_semantics = [#tpu.dimension_semantics<parallel>, #tpu.dimension_semantics<parallel>, #tpu.dimension_semantics<arbitrary>], iteration_bounds = array<i64: 1, 1, 1>, scalar_prefetch = 0 : i64, scratch_operands = 1 : i64, tpu.core_type = #tpu.core_type<tc>, window_params = [{transform_indices = @transform_0, window_bounds = array<i64: 104, 128>}, {transform_indices = @transform_1, window_bounds = array<i64: 128, 128>}, {transform_indices = @transform_2, window_bounds = array<i64: 1, 128>}, {transform_indices = @transform_3, window_bounds = array<i64: 104, 128>}]} {
    %c0_i32 = arith.constant 0 : i32
    %0 = arith.cmpi eq, %arg2, %c0_i32 : i32
    %1 = arith.extui %0 : i1 to i32
    %c0_i32_0 = arith.constant 0 : i32
    %2 = arith.cmpi ne, %1, %c0_i32_0 : i32
    scf.if %2 {
      %cst_10 = arith.constant 0.000000e+00 : f32
      %12 = vector.broadcast %cst_10 : f32 to vector<104x128xf32>
      %c0_11 = arith.constant 0 : index
      %c0_12 = arith.constant 0 : index
      %13 = vector.load %arg7[%c0_11, %c0_12] : memref<104x128xf32, #tpu.memory_space<vmem>>, vector<104x128xf32>
      tpu.vector_store %arg7[%c0_11, %c0_12], %12 {strides = array<i32>} : memref<104x128xf32, #tpu.memory_space<vmem>>, vector<104x128xf32>,
    } else {
    }
    %c0 = arith.constant 0 : index
    %c0_1 = arith.constant 0 : index
    %3 = vector.load %arg7[%c0, %c0_1] : memref<104x128xf32, #tpu.memory_space<vmem>>, vector<104x128xf32>
    %c0_2 = arith.constant 0 : index
    %c0_3 = arith.constant 0 : index
    %4 = vector.load %arg3[%c0_2, %c0_3] : memref<104x128xf32, #tpu.memory_space<vmem>>, vector<104x128xf32>
    %c0_4 = arith.constant 0 : index
    %c0_5 = arith.constant 0 : index
    %5 = vector.load %arg4[%c0_4, %c0_5] : memref<128x128xf32, #tpu.memory_space<vmem>>, vector<128x128xf32>
    %cst = arith.constant dense<0.000000e+00> : vector<104x128xf32>
    %6 = tpu.matmul %4, %5, %cst {dimension_numbers = #tpu.dot_dimension_numbers<[1], [0], [0], [1], [0, 0, 1, 1], [], []>} : vector<104x128xf32>, vector<128x128xf32>, vector<104x128xf32> -> vector<104x128xf32>
    %7 = arith.addf %3, %6 : vector<104x128xf32>
    %c0_6 = arith.constant 0 : index
    %c0_7 = arith.constant 0 : index
    %8 = vector.load %arg7[%c0_6, %c0_7] : memref<104x128xf32, #tpu.memory_space<vmem>>, vector<104x128xf32>
    tpu.vector_store %arg7[%c0_6, %c0_7], %7 {strides = array<i32>} : memref<104x128xf32, #tpu.memory_space<vmem>>, vector<104x128xf32>,
    %c0_i32_8 = arith.constant 0 : i32
    %9 = arith.cmpi eq, %arg2, %c0_i32_8 : i32
    %10 = arith.extui %9 : i1 to i32
    %c0_i32_9 = arith.constant 0 : i32
    %11 = arith.cmpi ne, %10, %c0_i32_9 : i32
    scf.if %11 {
      %c0_10 = arith.constant 0 : index
      %c0_11 = arith.constant 0 : index
      %12 = vector.load %arg7[%c0_10, %c0_11] : memref<104x128xf32, #tpu.memory_space<vmem>>, vector<104x128xf32>
      %c0_12 = arith.constant 0 : index
      %c0_13 = arith.constant 0 : index
      %13 = vector.load %arg5[%c0_12, %c0_13] : memref<1x128xf32, #tpu.memory_space<vmem>>, vector<1x128xf32>
      %14 = vector.broadcast %13 : vector<1x128xf32> to vector<104x128xf32>
      %15 = arith.addf %12, %14 : vector<104x128xf32>
      %cst_14 = arith.constant 0.000000e+00 : f32
      %16 = vector.broadcast %cst_14 : f32 to vector<104x128xf32>
      %17 = arith.maximumf %15, %16 : vector<104x128xf32>
      %c0_15 = arith.constant 0 : index
      %c0_16 = arith.constant 0 : index
      %18 = vector.load %arg6[%c0_15, %c0_16] : memref<104x128xf32, #tpu.memory_space<vmem>>, vector<104x128xf32>
      tpu.vector_store %arg6[%c0_15, %c0_16], %17 {strides = array<i32>} : memref<104x128xf32, #tpu.memory_space<vmem>>, vector<104x128xf32>,
    } else {
    }
    return
  }
  func.func @transform_0(%arg0: i32, %arg1: i32, %arg2: i32) -> (i32, i32) {
    %c0_i32 = arith.constant 0 : i32
    return %arg0, %arg2 : i32, i32
  }
  func.func @transform_1(%arg0: i32, %arg1: i32, %arg2: i32) -> (i32, i32) {
    %c0_i32 = arith.constant 0 : i32
    return %arg2, %arg1 : i32, i32
  }
  func.func @transform_2(%arg0: i32, %arg1: i32, %arg2: i32) -> (i32, i32) {
    %c0_i32 = arith.constant 0 : i32
    %c0_i32_0 = arith.constant 0 : i32
    return %c0_i32, %arg1 : i32, i32
  }
  func.func @transform_3(%arg0: i32, %arg1: i32, %arg2: i32) -> (i32, i32) {
    %c0_i32 = arith.constant 0 : i32
    return %arg0, %arg1 : i32, i32
  }
}

module attributes {stable_mosaic.version = 11 : i64} {
  func.func @_matmul_bias_relu_kernel(%arg0: i32, %arg1: i32, %arg2: i32, %arg3: memref<24x128xf32, #tpu.memory_space<vmem>>, %arg4: memref<128x128xf32, #tpu.memory_space<vmem>>, %arg5: memref<1x128xf32, #tpu.memory_space<vmem>>, %arg6: memref<24x128xf32, #tpu.memory_space<vmem>>, %arg7: memref<24x128xf32, #tpu.memory_space<vmem>>) attributes {dimension_semantics = [#tpu.dimension_semantics<parallel>, #tpu.dimension_semantics<parallel>, #tpu.dimension_semantics<arbitrary>], iteration_bounds = array<i64: 1, 1, 1>, scalar_prefetch = 0 : i64, scratch_operands = 1 : i64, tpu.core_type = #tpu.core_type<tc>, window_params = [{transform_indices = @transform_0, window_bounds = array<i64: 24, 128>}, {transform_indices = @transform_1, window_bounds = array<i64: 128, 128>}, {transform_indices = @transform_2, window_bounds = array<i64: 1, 128>}, {transform_indices = @transform_3, window_bounds = array<i64: 24, 128>}]} {
    %c0_i32 = arith.constant 0 : i32
    %0 = arith.cmpi eq, %arg2, %c0_i32 : i32
    %1 = arith.extui %0 : i1 to i32
    %c0_i32_0 = arith.constant 0 : i32
    %2 = arith.cmpi ne, %1, %c0_i32_0 : i32
    scf.if %2 {
      %cst_10 = arith.constant 0.000000e+00 : f32
      %12 = vector.broadcast %cst_10 : f32 to vector<24x128xf32>
      %c0_11 = arith.constant 0 : index
      %c0_12 = arith.constant 0 : index
      %13 = vector.load %arg7[%c0_11, %c0_12] : memref<24x128xf32, #tpu.memory_space<vmem>>, vector<24x128xf32>
      tpu.vector_store %arg7[%c0_11, %c0_12], %12 {strides = array<i32>} : memref<24x128xf32, #tpu.memory_space<vmem>>, vector<24x128xf32>,
    } else {
    }
    %c0 = arith.constant 0 : index
    %c0_1 = arith.constant 0 : index
    %3 = vector.load %arg7[%c0, %c0_1] : memref<24x128xf32, #tpu.memory_space<vmem>>, vector<24x128xf32>
    %c0_2 = arith.constant 0 : index
    %c0_3 = arith.constant 0 : index
    %4 = vector.load %arg3[%c0_2, %c0_3] : memref<24x128xf32, #tpu.memory_space<vmem>>, vector<24x128xf32>
    %c0_4 = arith.constant 0 : index
    %c0_5 = arith.constant 0 : index
    %5 = vector.load %arg4[%c0_4, %c0_5] : memref<128x128xf32, #tpu.memory_space<vmem>>, vector<128x128xf32>
    %cst = arith.constant dense<0.000000e+00> : vector<24x128xf32>
    %6 = tpu.matmul %4, %5, %cst {dimension_numbers = #tpu.dot_dimension_numbers<[1], [0], [0], [1], [0, 0, 1, 1], [], []>} : vector<24x128xf32>, vector<128x128xf32>, vector<24x128xf32> -> vector<24x128xf32>
    %7 = arith.addf %3, %6 : vector<24x128xf32>
    %c0_6 = arith.constant 0 : index
    %c0_7 = arith.constant 0 : index
    %8 = vector.load %arg7[%c0_6, %c0_7] : memref<24x128xf32, #tpu.memory_space<vmem>>, vector<24x128xf32>
    tpu.vector_store %arg7[%c0_6, %c0_7], %7 {strides = array<i32>} : memref<24x128xf32, #tpu.memory_space<vmem>>, vector<24x128xf32>,
    %c0_i32_8 = arith.constant 0 : i32
    %9 = arith.cmpi eq, %arg2, %c0_i32_8 : i32
    %10 = arith.extui %9 : i1 to i32
    %c0_i32_9 = arith.constant 0 : i32
    %11 = arith.cmpi ne, %10, %c0_i32_9 : i32
    scf.if %11 {
      %c0_10 = arith.constant 0 : index
      %c0_11 = arith.constant 0 : index
      %12 = vector.load %arg7[%c0_10, %c0_11] : memref<24x128xf32, #tpu.memory_space<vmem>>, vector<24x128xf32>
      %c0_12 = arith.constant 0 : index
      %c0_13 = arith.constant 0 : index
      %13 = vector.load %arg5[%c0_12, %c0_13] : memref<1x128xf32, #tpu.memory_space<vmem>>, vector<1x128xf32>
      %14 = vector.broadcast %13 : vector<1x128xf32> to vector<24x128xf32>
      %15 = arith.addf %12, %14 : vector<24x128xf32>
      %cst_14 = arith.constant 0.000000e+00 : f32
      %16 = vector.broadcast %cst_14 : f32 to vector<24x128xf32>
      %17 = arith.maximumf %15, %16 : vector<24x128xf32>
      %c0_15 = arith.constant 0 : index
      %c0_16 = arith.constant 0 : index
      %18 = vector.load %arg6[%c0_15, %c0_16] : memref<24x128xf32, #tpu.memory_space<vmem>>, vector<24x128xf32>
      tpu.vector_store %arg6[%c0_15, %c0_16], %17 {strides = array<i32>} : memref<24x128xf32, #tpu.memory_space<vmem>>, vector<24x128xf32>,
    } else {
    }
    return
  }
  func.func @transform_0(%arg0: i32, %arg1: i32, %arg2: i32) -> (i32, i32) {
    %c0_i32 = arith.constant 0 : i32
    return %arg0, %arg2 : i32, i32
  }
  func.func @transform_1(%arg0: i32, %arg1: i32, %arg2: i32) -> (i32, i32) {
    %c0_i32 = arith.constant 0 : i32
    return %arg2, %arg1 : i32, i32
  }
  func.func @transform_2(%arg0: i32, %arg1: i32, %arg2: i32) -> (i32, i32) {
    %c0_i32 = arith.constant 0 : i32
    %c0_i32_0 = arith.constant 0 : i32
    return %c0_i32, %arg1 : i32, i32
  }
  func.func @transform_3(%arg0: i32, %arg1: i32, %arg2: i32) -> (i32, i32) {
    %c0_i32 = arith.constant 0 : i32
    return %arg0, %arg1 : i32, i32
  }
}

module attributes {stable_mosaic.version = 11 : i64} {
  func.func @_matmul_bias_relu_kernel(%arg0: i32, %arg1: i32, %arg2: i32, %arg3: memref<8x256xf32, #tpu.memory_space<vmem>>, %arg4: memref<256x128xf32, #tpu.memory_space<vmem>>, %arg5: memref<1x128xf32, #tpu.memory_space<vmem>>, %arg6: memref<8x128xf32, #tpu.memory_space<vmem>>, %arg7: memref<8x128xf32, #tpu.memory_space<vmem>>) attributes {dimension_semantics = [#tpu.dimension_semantics<parallel>, #tpu.dimension_semantics<parallel>, #tpu.dimension_semantics<arbitrary>], iteration_bounds = array<i64: 1, 1, 1>, scalar_prefetch = 0 : i64, scratch_operands = 1 : i64, tpu.core_type = #tpu.core_type<tc>, window_params = [{transform_indices = @transform_0, window_bounds = array<i64: 8, 256>}, {transform_indices = @transform_1, window_bounds = array<i64: 256, 128>}, {transform_indices = @transform_2, window_bounds = array<i64: 1, 128>}, {transform_indices = @transform_3, window_bounds = array<i64: 8, 128>}]} {
    %c0_i32 = arith.constant 0 : i32
    %0 = arith.cmpi eq, %arg2, %c0_i32 : i32
    %1 = arith.extui %0 : i1 to i32
    %c0_i32_0 = arith.constant 0 : i32
    %2 = arith.cmpi ne, %1, %c0_i32_0 : i32
    scf.if %2 {
      %cst_10 = arith.constant 0.000000e+00 : f32
      %12 = vector.broadcast %cst_10 : f32 to vector<8x128xf32>
      %c0_11 = arith.constant 0 : index
      %c0_12 = arith.constant 0 : index
      %13 = vector.load %arg7[%c0_11, %c0_12] : memref<8x128xf32, #tpu.memory_space<vmem>>, vector<8x128xf32>
      tpu.vector_store %arg7[%c0_11, %c0_12], %12 {strides = array<i32>} : memref<8x128xf32, #tpu.memory_space<vmem>>, vector<8x128xf32>,
    } else {
    }
    %c0 = arith.constant 0 : index
    %c0_1 = arith.constant 0 : index
    %3 = vector.load %arg7[%c0, %c0_1] : memref<8x128xf32, #tpu.memory_space<vmem>>, vector<8x128xf32>
    %c0_2 = arith.constant 0 : index
    %c0_3 = arith.constant 0 : index
    %4 = vector.load %arg3[%c0_2, %c0_3] : memref<8x256xf32, #tpu.memory_space<vmem>>, vector<8x256xf32>
    %c0_4 = arith.constant 0 : index
    %c0_5 = arith.constant 0 : index
    %5 = vector.load %arg4[%c0_4, %c0_5] : memref<256x128xf32, #tpu.memory_space<vmem>>, vector<256x128xf32>
    %cst = arith.constant dense<0.000000e+00> : vector<8x128xf32>
    %6 = tpu.matmul %4, %5, %cst {dimension_numbers = #tpu.dot_dimension_numbers<[1], [0], [0], [1], [0, 0, 1, 1], [], []>} : vector<8x256xf32>, vector<256x128xf32>, vector<8x128xf32> -> vector<8x128xf32>
    %7 = arith.addf %3, %6 : vector<8x128xf32>
    %c0_6 = arith.constant 0 : index
    %c0_7 = arith.constant 0 : index
    %8 = vector.load %arg7[%c0_6, %c0_7] : memref<8x128xf32, #tpu.memory_space<vmem>>, vector<8x128xf32>
    tpu.vector_store %arg7[%c0_6, %c0_7], %7 {strides = array<i32>} : memref<8x128xf32, #tpu.memory_space<vmem>>, vector<8x128xf32>,
    %c0_i32_8 = arith.constant 0 : i32
    %9 = arith.cmpi eq, %arg2, %c0_i32_8 : i32
    %10 = arith.extui %9 : i1 to i32
    %c0_i32_9 = arith.constant 0 : i32
    %11 = arith.cmpi ne, %10, %c0_i32_9 : i32
    scf.if %11 {
      %c0_10 = arith.constant 0 : index
      %c0_11 = arith.constant 0 : index
      %12 = vector.load %arg7[%c0_10, %c0_11] : memref<8x128xf32, #tpu.memory_space<vmem>>, vector<8x128xf32>
      %c0_12 = arith.constant 0 : index
      %c0_13 = arith.constant 0 : index
      %13 = vector.load %arg5[%c0_12, %c0_13] : memref<1x128xf32, #tpu.memory_space<vmem>>, vector<1x128xf32>
      %14 = vector.broadcast %13 : vector<1x128xf32> to vector<8x128xf32>
      %15 = arith.addf %12, %14 : vector<8x128xf32>
      %cst_14 = arith.constant 0.000000e+00 : f32
      %16 = vector.broadcast %cst_14 : f32 to vector<8x128xf32>
      %17 = arith.maximumf %15, %16 : vector<8x128xf32>
      %c0_15 = arith.constant 0 : index
      %c0_16 = arith.constant 0 : index
      %18 = vector.load %arg6[%c0_15, %c0_16] : memref<8x128xf32, #tpu.memory_space<vmem>>, vector<8x128xf32>
      tpu.vector_store %arg6[%c0_15, %c0_16], %17 {strides = array<i32>} : memref<8x128xf32, #tpu.memory_space<vmem>>, vector<8x128xf32>,
    } else {
    }
    return
  }
  func.func @transform_0(%arg0: i32, %arg1: i32, %arg2: i32) -> (i32, i32) {
    %c0_i32 = arith.constant 0 : i32
    return %arg0, %arg2 : i32, i32
  }
  func.func @transform_1(%arg0: i32, %arg1: i32, %arg2: i32) -> (i32, i32) {
    %c0_i32 = arith.constant 0 : i32
    return %arg2, %arg1 : i32, i32
  }
  func.func @transform_2(%arg0: i32, %arg1: i32, %arg2: i32) -> (i32, i32) {
    %c0_i32 = arith.constant 0 : i32
    %c0_i32_0 = arith.constant 0 : i32
    return %c0_i32, %arg1 : i32, i32
  }
  func.func @transform_3(%arg0: i32, %arg1: i32, %arg2: i32) -> (i32, i32) {
    %c0_i32 = arith.constant 0 : i32
    return %arg0, %arg1 : i32, i32
  }
}

module attributes {stable_mosaic.version = 11 : i64} {
  func.func @_matmul_bias_relu_kernel(%arg0: i32, %arg1: i32, %arg2: i32, %arg3: memref<8x128xf32, #tpu.memory_space<vmem>>, %arg4: memref<128x128xf32, #tpu.memory_space<vmem>>, %arg5: memref<1x128xf32, #tpu.memory_space<vmem>>, %arg6: memref<8x128xf32, #tpu.memory_space<vmem>>, %arg7: memref<8x128xf32, #tpu.memory_space<vmem>>) attributes {dimension_semantics = [#tpu.dimension_semantics<parallel>, #tpu.dimension_semantics<parallel>, #tpu.dimension_semantics<arbitrary>], iteration_bounds = array<i64: 1, 1, 1>, scalar_prefetch = 0 : i64, scratch_operands = 1 : i64, tpu.core_type = #tpu.core_type<tc>, window_params = [{transform_indices = @transform_0, window_bounds = array<i64: 8, 128>}, {transform_indices = @transform_1, window_bounds = array<i64: 128, 128>}, {transform_indices = @transform_2, window_bounds = array<i64: 1, 128>}, {transform_indices = @transform_3, window_bounds = array<i64: 8, 128>}]} {
    %c0_i32 = arith.constant 0 : i32
    %0 = arith.cmpi eq, %arg2, %c0_i32 : i32
    %1 = arith.extui %0 : i1 to i32
    %c0_i32_0 = arith.constant 0 : i32
    %2 = arith.cmpi ne, %1, %c0_i32_0 : i32
    scf.if %2 {
      %cst_10 = arith.constant 0.000000e+00 : f32
      %12 = vector.broadcast %cst_10 : f32 to vector<8x128xf32>
      %c0_11 = arith.constant 0 : index
      %c0_12 = arith.constant 0 : index
      %13 = vector.load %arg7[%c0_11, %c0_12] : memref<8x128xf32, #tpu.memory_space<vmem>>, vector<8x128xf32>
      tpu.vector_store %arg7[%c0_11, %c0_12], %12 {strides = array<i32>} : memref<8x128xf32, #tpu.memory_space<vmem>>, vector<8x128xf32>,
    } else {
    }
    %c0 = arith.constant 0 : index
    %c0_1 = arith.constant 0 : index
    %3 = vector.load %arg7[%c0, %c0_1] : memref<8x128xf32, #tpu.memory_space<vmem>>, vector<8x128xf32>
    %c0_2 = arith.constant 0 : index
    %c0_3 = arith.constant 0 : index
    %4 = vector.load %arg3[%c0_2, %c0_3] : memref<8x128xf32, #tpu.memory_space<vmem>>, vector<8x128xf32>
    %c0_4 = arith.constant 0 : index
    %c0_5 = arith.constant 0 : index
    %5 = vector.load %arg4[%c0_4, %c0_5] : memref<128x128xf32, #tpu.memory_space<vmem>>, vector<128x128xf32>
    %cst = arith.constant dense<0.000000e+00> : vector<8x128xf32>
    %6 = tpu.matmul %4, %5, %cst {dimension_numbers = #tpu.dot_dimension_numbers<[1], [0], [0], [1], [0, 0, 1, 1], [], []>} : vector<8x128xf32>, vector<128x128xf32>, vector<8x128xf32> -> vector<8x128xf32>
    %7 = arith.addf %3, %6 : vector<8x128xf32>
    %c0_6 = arith.constant 0 : index
    %c0_7 = arith.constant 0 : index
    %8 = vector.load %arg7[%c0_6, %c0_7] : memref<8x128xf32, #tpu.memory_space<vmem>>, vector<8x128xf32>
    tpu.vector_store %arg7[%c0_6, %c0_7], %7 {strides = array<i32>} : memref<8x128xf32, #tpu.memory_space<vmem>>, vector<8x128xf32>,
    %c0_i32_8 = arith.constant 0 : i32
    %9 = arith.cmpi eq, %arg2, %c0_i32_8 : i32
    %10 = arith.extui %9 : i1 to i32
    %c0_i32_9 = arith.constant 0 : i32
    %11 = arith.cmpi ne, %10, %c0_i32_9 : i32
    scf.if %11 {
      %c0_10 = arith.constant 0 : index
      %c0_11 = arith.constant 0 : index
      %12 = vector.load %arg7[%c0_10, %c0_11] : memref<8x128xf32, #tpu.memory_space<vmem>>, vector<8x128xf32>
      %c0_12 = arith.constant 0 : index
      %c0_13 = arith.constant 0 : index
      %13 = vector.load %arg5[%c0_12, %c0_13] : memref<1x128xf32, #tpu.memory_space<vmem>>, vector<1x128xf32>
      %14 = vector.broadcast %13 : vector<1x128xf32> to vector<8x128xf32>
      %15 = arith.addf %12, %14 : vector<8x128xf32>
      %cst_14 = arith.constant 0.000000e+00 : f32
      %16 = vector.broadcast %cst_14 : f32 to vector<8x128xf32>
      %17 = arith.maximumf %15, %16 : vector<8x128xf32>
      %c0_15 = arith.constant 0 : index
      %c0_16 = arith.constant 0 : index
      %18 = vector.load %arg6[%c0_15, %c0_16] : memref<8x128xf32, #tpu.memory_space<vmem>>, vector<8x128xf32>
      tpu.vector_store %arg6[%c0_15, %c0_16], %17 {strides = array<i32>} : memref<8x128xf32, #tpu.memory_space<vmem>>, vector<8x128xf32>,
    } else {
    }
    return
  }
  func.func @transform_0(%arg0: i32, %arg1: i32, %arg2: i32) -> (i32, i32) {
    %c0_i32 = arith.constant 0 : i32
    return %arg0, %arg2 : i32, i32
  }
  func.func @transform_1(%arg0: i32, %arg1: i32, %arg2: i32) -> (i32, i32) {
    %c0_i32 = arith.constant 0 : i32
    return %arg2, %arg1 : i32, i32
  }
  func.func @transform_2(%arg0: i32, %arg1: i32, %arg2: i32) -> (i32, i32) {
    %c0_i32 = arith.constant 0 : i32
    %c0_i32_0 = arith.constant 0 : i32
    return %c0_i32, %arg1 : i32, i32
  }
  func.func @transform_3(%arg0: i32, %arg1: i32, %arg2: i32) -> (i32, i32) {
    %c0_i32 = arith.constant 0 : i32
    return %arg0, %arg1 : i32, i32
  }
}

</mosaic_0001>

<llo_original>
// kernel: _forward.4
$region0: #{_forward.4}
  #allocation0 [shape = 'u32[]', space=smem, size = 0x4, offset = 0x4, fixed_abs, tag = 'smem constant byte address 0x4 - core index']
  #allocation1 [shape = 'u32[144,128]{1,0:T(1,128)}', space=vmem, size = 0x12000, scoped, tag = 'internal scratch']
  #allocation2 [shape = 'f32[104,128]{1,0:T(8,128)}', space=vmem, size = 0xd000, scoped, tag = 'scratch operand']
  %s0 = inlined_call_operand.vmem [shape: f32[104,128], index: 0, kind: input, shape index: {}]
  %s1 = inlined_call_operand.vmem [shape: f32[128,128], index: 1, kind: input, shape index: {}]
  %s2 = inlined_call_operand.vmem [shape: f32[1,128], index: 2, kind: input, shape index: {}]
  %s3 = inlined_call_operand.vmem [shape: f32[104,128], index: 3, kind: output, shape index: {}]
  %s4 = sld [smem:[#allocation0]]
  $region30: #{_forward.4} parent=0
    _
  %s6 = ssub.s32 1, %s4
  %s7 = scalar_select 0, %s6, %s4
  // Predicated region
  $region2: #{_forward.4} parent=0 // pred_check
    _
  $region3: #{_forward.4} parent=0 // pred_check_branch
    %9 = sbr.rel (0) target = $region5
  $region4: #{_forward.4} parent=0 // pred_region
    _
  $region5: #{_forward.4} parent=0 // pred_fallthru
    _
  // Predicated region
  $region6: #{_forward.4} parent=0 // pred_check
    _
  $region7: #{_forward.4} parent=0 // pred_check_branch
    %11 = sbr.rel (0) target = $region9
  $region8: #{_forward.4} parent=0 // pred_region
    _
  $region9: #{_forward.4} parent=0 // pred_fallthru
    _
  // Predicated region
  $region10: #{_forward.4} parent=0 // pred_check
    _
  $region11: #{_forward.4} parent=0 // pred_check_branch
    %13 = sbr.rel (0) target = $region13
  $region12: #{_forward.4} parent=0 // pred_region
    _
  $region13: #{_forward.4} parent=0 // pred_fallthru
    _
  %p14 = scmp.eq.s32.totalorder 0, 0
  // Predicated region
  $region14: #{_forward.4} parent=0 // pred_check
    %p15 = pneg %p14
  $region15: #{_forward.4} parent=0 // pred_check_branch
    %17 = sbr.rel (%p15) target = $region17
  $region16: #{_forward.4} parent=0 // pred_region
    %18 = vst [vmem:[#allocation2] sm:$0xff] 0.0
    %19 = vst [vmem:[#allocation2 + $0x8] sm:$0xff] 0.0
    %20 = vst [vmem:[#allocation2 + $0x10] sm:$0xff] 0.0
    %21 = vst [vmem:[#allocation2 + $0x18] sm:$0xff] 0.0
    %22 = vst [vmem:[#allocation2 + $0x20] sm:$0xff] 0.0
    %23 = vst [vmem:[#allocation2 + $0x28] sm:$0xff] 0.0
    %24 = vst [vmem:[#allocation2 + $0x30] sm:$0xff] 0.0
    %25 = vst [vmem:[#allocation2 + $0x38] sm:$0xff] 0.0
    %26 = vst [vmem:[#allocation2 + $0x40] sm:$0xff] 0.0
    %27 = vst [vmem:[#allocation2 + $0x48] sm:$0xff] 0.0
    %28 = vst [vmem:[#allocation2 + $0x50] sm:$0xff] 0.0
    %29 = vst [vmem:[#allocation2 + $0x58] sm:$0xff] 0.0
    %30 = vst [vmem:[#allocation2 + $0x60] sm:$0xff] 0.0
  $region17: #{_forward.4} parent=0 // pred_fallthru
    _
  %v31 = vld [vmem:[#allocation2] sm:$0xff]
  %v32 = vld [vmem:[#allocation2 + $0x8] sm:$0xff]
  %v33 = vld [vmem:[#allocation2 + $0x10] sm:$0xff]
  %v34 = vld [vmem:[#allocation2 + $0x18] sm:$0xff]
  %v35 = vld [vmem:[#allocation2 + $0x20] sm:$0xff]
  %v36 = vld [vmem:[#allocation2 + $0x28] sm:$0xff]
  %v37 = vld [vmem:[#allocation2 + $0x30] sm:$0xff]
  %v38 = vld [vmem:[#allocation2 + $0x38] sm:$0xff]
  %v39 = vld [vmem:[#allocation2 + $0x40] sm:$0xff]
  %v40 = vld [vmem:[#allocation2 + $0x48] sm:$0xff]
  %v41 = vld [vmem:[#allocation2 + $0x50] sm:$0xff]
  %v42 = vld [vmem:[#allocation2 + $0x58] sm:$0xff]
  %v43 = vld [vmem:[#allocation2 + $0x60] sm:$0xff]
  %v44 = vld [vmem:[%s0] sm:$0xff]
  %v45 = vld [vmem:[%s0 + $0x8] sm:$0xff]
  %v46 = vld [vmem:[%s0 + $0x10] sm:$0xff]
  %v47 = vld [vmem:[%s0 + $0x18] sm:$0xff]
  %v48 = vld [vmem:[%s0 + $0x20] sm:$0xff]
  %v49 = vld [vmem:[%s0 + $0x28] sm:$0xff]
  %v50 = vld [vmem:[%s0 + $0x30] sm:$0xff]
  %v51 = vld [vmem:[%s0 + $0x38] sm:$0xff]
  %v52 = vld [vmem:[%s0 + $0x40] sm:$0xff]
  %v53 = vld [vmem:[%s0 + $0x48] sm:$0xff]
  %v54 = vld [vmem:[%s0 + $0x50] sm:$0xff]
  %v55 = vld [vmem:[%s0 + $0x58] sm:$0xff]
  %v56 = vld [vmem:[%s0 + $0x60] sm:$0xff]
  %v57 = vld [vmem:[%s1] sm:$0xff]
  %v58 = vld [vmem:[%s1 + $0x8] sm:$0xff]
  %v59 = vld [vmem:[%s1 + $0x10] sm:$0xff]
  %v60 = vld [vmem:[%s1 + $0x18] sm:$0xff]
  %v61 = vld [vmem:[%s1 + $0x20] sm:$0xff]
  %v62 = vld [vmem:[%s1 + $0x28] sm:$0xff]
  %v63 = vld [vmem:[%s1 + $0x30] sm:$0xff]
  %v64 = vld [vmem:[%s1 + $0x38] sm:$0xff]
  %v65 = vld [vmem:[%s1 + $0x40] sm:$0xff]
  %v66 = vld [vmem:[%s1 + $0x48] sm:$0xff]
  %v67 = vld [vmem:[%s1 + $0x50] sm:$0xff]
  %v68 = vld [vmem:[%s1 + $0x58] sm:$0xff]
  %v69 = vld [vmem:[%s1 + $0x60] sm:$0xff]
  %v70 = vld [vmem:[%s1 + $0x68] sm:$0xff]
  %v71 = vld [vmem:[%s1 + $0x70] sm:$0xff]
  %v72 = vld [vmem:[%s1 + $0x78] sm:$0xff]
  %73 = vmatprep.subr.mxu0 0.0
  %74 = vmatpush1.msra.mxu0 %v57
  %75 = vmatprep.subr.mxu0 0.0
  %76 = vmatpush1.msra.mxu0 %v58
  %77 = vmatprep.subr.mxu0 0.0
  %78 = vmatpush1.msra.mxu0 %v59
  %79 = vmatprep.subr.mxu0 0.0
  %80 = vmatpush1.msra.mxu0 %v60
  %81 = vmatprep.subr.mxu0 0.0
  %82 = vmatpush1.msra.mxu0 %v61
  %83 = vmatprep.subr.mxu0 0.0
  %84 = vmatpush1.msra.mxu0 %v62
  %85 = vmatprep.subr.mxu0 0.0
  %86 = vmatpush1.msra.mxu0 %v63
  %87 = vmatprep.subr.mxu0 0.0
  %88 = vmatpush1.msra.mxu0 %v64
  %89 = vmatprep.subr.mxu0 0.0
  %90 = vmatpush1.msra.mxu0 %v65
  %91 = vmatprep.subr.mxu0 0.0
  %92 = vmatpush1.msra.mxu0 %v66
  %93 = vmatprep.subr.mxu0 0.0
  %94 = vmatpush1.msra.mxu0 %v67
  %95 = vmatprep.subr.mxu0 0.0
  %96 = vmatpush1.msra.mxu0 %v68
  %97 = vmatprep.subr.mxu0 0.0
  %98 = vmatpush1.msra.mxu0 %v69
  %99 = vmatprep.subr.mxu0 0.0
  %100 = vmatpush1.msra.mxu0 %v70
  %101 = vmatprep.subr.mxu0 0.0
  %102 = vmatpush1.msra.mxu0 %v71
  %103 = vmatprep.subr.mxu0 0.0
  %104 = vmatpush1.msra.mxu0 %v72
  %105 = vmatprep.subr.mxu0 0.0
  %106 = vmatpush1.msra.mxu0 0.0
  %107 = vmatprep.subr.mxu0 0.0
  %108 = vmatpush1.msra.mxu0 0.0
  %109 = vmatprep.subr.mxu0 0.0
  %110 = vmatpush1.msra.mxu0 0.0
  %111 = vmatprep.subr.mxu0 0.0
  %112 = vmatpush1.msra.mxu0 0.0
  %113 = vmatprep.subr.mxu0 0.0
  %114 = vmatpush1.msra.mxu0 0.0
  %115 = vmatprep.subr.mxu0 0.0
  %116 = vmatpush1.msra.mxu0 0.0
  %117 = vmatprep.subr.mxu0 0.0
  %118 = vmatpush1.msra.mxu0 0.0
  %119 = vmatprep.subr.mxu0 0.0
  %120 = vmatpush1.msra.mxu0 0.0
  %121 = vmatprep.subr.mxu0 0.0
  %122 = vmatpush1.msra.mxu0 0.0
  %123 = vmatprep.subr.mxu0 0.0
  %124 = vmatpush1.msra.mxu0 0.0
  %125 = vmatprep.subr.mxu0 0.0
  %126 = vmatpush1.msra.mxu0 0.0
  %127 = vmatprep.subr.mxu0 0.0
  %128 = vmatpush1.msra.mxu0 0.0
  %129 = vmatprep.subr.mxu0 0.0
  %130 = vmatpush1.msra.mxu0 0.0
  %131 = vmatprep.subr.mxu0 0.0
  %132 = vmatpush1.msra.mxu0 0.0
  %133 = vmatprep.subr.mxu0 0.0
  %134 = vmatpush1.msra.mxu0 0.0
  %135 = vmatprep.subr.mxu0 0.0
  %136 = vmatpush1.msra.mxu0 0.0
  %137 = vmatprep.mubr.f32.mxu0 0.0
  %138 = vmatmul.mubr.f32.gmra.mrb[0].mxu0 %v44
  %v139 = vpop.f32.mrb[0].mxu0
  %v140 = vadd.f32 0.0, %v139
  %v141 = vpop.f32.mrb[0].mxu0
  %142 = vmatprep.mubr.f32.mxu0 0.0
  %143 = vmatmul.mubr.f32.gmra.mrb[0].mxu0 %v45
  %v144 = vpop.f32.mrb[0].mxu0
  %v145 = vadd.f32 0.0, %v144
  %v146 = vpop.f32.mrb[0].mxu0
  %147 = vmatprep.mubr.f32.mxu0 0.0
  %148 = vmatmul.mubr.f32.gmra.mrb[0].mxu0 %v46
  %v149 = vpop.f32.mrb[0].mxu0
  %v150 = vadd.f32 0.0, %v149
  %v151 = vpop.f32.mrb[0].mxu0
  %152 = vmatprep.mubr.f32.mxu0 0.0
  %153 = vmatmul.mubr.f32.gmra.mrb[0].mxu0 %v47
  %v154 = vpop.f32.mrb[0].mxu0
  %v155 = vadd.f32 0.0, %v154
  %v156 = vpop.f32.mrb[0].mxu0
  %157 = vmatprep.mubr.f32.mxu0 0.0
  %158 = vmatmul.mubr.f32.gmra.mrb[0].mxu0 %v48
  %v159 = vpop.f32.mrb[0].mxu0
  %v160 = vadd.f32 0.0, %v159
  %v161 = vpop.f32.mrb[0].mxu0
  %162 = vmatprep.mubr.f32.mxu0 0.0
  %163 = vmatmul.mubr.f32.gmra.mrb[0].mxu0 %v49
  %v164 = vpop.f32.mrb[0].mxu0
  %v165 = vadd.f32 0.0, %v164
  %v166 = vpop.f32.mrb[0].mxu0
  %167 = vmatprep.mubr.f32.mxu0 0.0
  %168 = vmatmul.mubr.f32.gmra.mrb[0].mxu0 %v50
  %v169 = vpop.f32.mrb[0].mxu0
  %v170 = vadd.f32 0.0, %v169
  %v171 = vpop.f32.mrb[0].mxu0
  %172 = vmatprep.mubr.f32.mxu0 0.0
  %173 = vmatmul.mubr.f32.gmra.mrb[0].mxu0 %v51
  %v174 = vpop.f32.mrb[0].mxu0
  %v175 = vadd.f32 0.0, %v174
  %v176 = vpop.f32.mrb[0].mxu0
  %177 = vmatprep.mubr.f32.mxu0 0.0
  %178 = vmatmul.mubr.f32.gmra.mrb[0].mxu0 %v52
  %v179 = vpop.f32.mrb[0].mxu0
  %v180 = vadd.f32 0.0, %v179
  %v181 = vpop.f32.mrb[0].mxu0
  %182 = vmatprep.mubr.f32.mxu0 0.0
  %183 = vmatmul.mubr.f32.gmra.mrb[0].mxu0 %v53
  %v184 = vpop.f32.mrb[0].mxu0
  %v185 = vadd.f32 0.0, %v184
  %v186 = vpop.f32.mrb[0].mxu0
  %187 = vmatprep.mubr.f32.mxu0 0.0
  %188 = vmatmul.mubr.f32.gmra.mrb[0].mxu0 %v54
  %v189 = vpop.f32.mrb[0].mxu0
  %v190 = vadd.f32 0.0, %v189
  %v191 = vpop.f32.mrb[0].mxu0
  %192 = vmatprep.mubr.f32.mxu0 0.0
  %193 = vmatmul.mubr.f32.gmra.mrb[0].mxu0 %v55
  %v194 = vpop.f32.mrb[0].mxu0
  %v195 = vadd.f32 0.0, %v194
  %v196 = vpop.f32.mrb[0].mxu0
  %197 = vmatprep.mubr.f32.mxu0 0.0
  %198 = vmatmul.mubr.f32.gmra.mrb[0].mxu0 %v56
  %v199 = vpop.f32.mrb[0].mxu0
  %v200 = vadd.f32 0.0, %v199
  %v201 = vpop.f32.mrb[0].mxu0
  %202 = vdwg.mxu0
  %v203 = vadd.f32 %v31, %v140
  %v204 = vadd.f32 %v32, %v145
  %v205 = vadd.f32 %v33, %v150
  %v206 = vadd.f32 %v34, %v155
  %v207 = vadd.f32 %v35, %v160
  %v208 = vadd.f32 %v36, %v165
  %v209 = vadd.f32 %v37, %v170
  %v210 = vadd.f32 %v38, %v175
  %v211 = vadd.f32 %v39, %v180
  %v212 = vadd.f32 %v40, %v185
  %v213 = vadd.f32 %v41, %v190
  %v214 = vadd.f32 %v42, %v195
  %v215 = vadd.f32 %v43, %v200
  %216 = vst [vmem:[#allocation2] sm:$0xff] %v203
  %217 = vst [vmem:[#allocation2 + $0x8] sm:$0xff] %v204
  %218 = vst [vmem:[#allocation2 + $0x10] sm:$0xff] %v205
  %219 = vst [vmem:[#allocation2 + $0x18] sm:$0xff] %v206
  %220 = vst [vmem:[#allocation2 + $0x20] sm:$0xff] %v207
  %221 = vst [vmem:[#allocation2 + $0x28] sm:$0xff] %v208
  %222 = vst [vmem:[#allocation2 + $0x30] sm:$0xff] %v209
  %223 = vst [vmem:[#allocation2 + $0x38] sm:$0xff] %v210
  %224 = vst [vmem:[#allocation2 + $0x40] sm:$0xff] %v211
  %225 = vst [vmem:[#allocation2 + $0x48] sm:$0xff] %v212
  %226 = vst [vmem:[#allocation2 + $0x50] sm:$0xff] %v213
  %227 = vst [vmem:[#allocation2 + $0x58] sm:$0xff] %v214
  %228 = vst [vmem:[#allocation2 + $0x60] sm:$0xff] %v215
  // Predicated region
  $region18: #{_forward.4} parent=0 // pred_check
    %p229 = pneg %p14
  $region19: #{_forward.4} parent=0 // pred_check_branch
    %231 = sbr.rel (%p229) target = $region21
  $region20: #{_forward.4} parent=0 // pred_region
    %v232 = vld [vmem:[#allocation2] sm:$0xff]
    %v233 = vld [vmem:[#allocation2 + $0x8] sm:$0xff]
    %v234 = vld [vmem:[#allocation2 + $0x10] sm:$0xff]
    %v235 = vld [vmem:[#allocation2 + $0x18] sm:$0xff]
    %v236 = vld [vmem:[#allocation2 + $0x20] sm:$0xff]
    %v237 = vld [vmem:[#allocation2 + $0x28] sm:$0xff]
    %v238 = vld [vmem:[#allocation2 + $0x30] sm:$0xff]
    %v239 = vld [vmem:[#allocation2 + $0x38] sm:$0xff]
    %v240 = vld [vmem:[#allocation2 + $0x40] sm:$0xff]
    %v241 = vld [vmem:[#allocation2 + $0x48] sm:$0xff]
    %v242 = vld [vmem:[#allocation2 + $0x50] sm:$0xff]
    %v243 = vld [vmem:[#allocation2 + $0x58] sm:$0xff]
    %v244 = vld [vmem:[#allocation2 + $0x60] sm:$0xff]
    %v245 = vld [vmem:[%s2] sm:$0x1]
    %v247 = vlaneseq
    %v248 = vshrl.u32 %v247, 7
    %v249 = vsub.s32 0, %v248
    %v250 = vrot.slane %v245, %v249
    %v252 = vadd.f32 %v232, %v250
    %v253 = vadd.f32 %v233, %v250
    %v254 = vadd.f32 %v234, %v250
    %v255 = vadd.f32 %v235, %v250
    %v256 = vadd.f32 %v236, %v250
    %v257 = vadd.f32 %v237, %v250
    %v258 = vadd.f32 %v238, %v250
    %v259 = vadd.f32 %v239, %v250
    %v260 = vadd.f32 %v240, %v250
    %v261 = vadd.f32 %v241, %v250
    %v262 = vadd.f32 %v242, %v250
    %v263 = vadd.f32 %v243, %v250
    %v264 = vadd.f32 %v244, %v250
    %v265 = vmax.f32 %v252, 0.0
    %v266 = vmax.f32 %v253, 0.0
    %v267 = vmax.f32 %v254, 0.0
    %v268 = vmax.f32 %v255, 0.0
    %v269 = vmax.f32 %v256, 0.0
    %v270 = vmax.f32 %v257, 0.0
    %v271 = vmax.f32 %v258, 0.0
    %v272 = vmax.f32 %v259, 0.0
    %v273 = vmax.f32 %v260, 0.0
    %v274 = vmax.f32 %v261, 0.0
    %v275 = vmax.f32 %v262, 0.0
    %v276 = vmax.f32 %v263, 0.0
    %v277 = vmax.f32 %v264, 0.0
    %278 = vst [vmem:[%s3] sm:$0xff] %v265
    %279 = vst [vmem:[%s3 + $0x8] sm:$0xff] %v266
    %280 = vst [vmem:[%s3 + $0x10] sm:$0xff] %v267
    %281 = vst [vmem:[%s3 + $0x18] sm:$0xff] %v268
    %282 = vst [vmem:[%s3 + $0x20] sm:$0xff] %v269
    %283 = vst [vmem:[%s3 + $0x28] sm:$0xff] %v270
    %284 = vst [vmem:[%s3 + $0x30] sm:$0xff] %v271
    %285 = vst [vmem:[%s3 + $0x38] sm:$0xff] %v272
    %286 = vst [vmem:[%s3 + $0x40] sm:$0xff] %v273
    %287 = vst [vmem:[%s3 + $0x48] sm:$0xff] %v274
    %288 = vst [vmem:[%s3 + $0x50] sm:$0xff] %v275
    %289 = vst [vmem:[%s3 + $0x58] sm:$0xff] %v276
    %290 = vst [vmem:[%s3 + $0x60] sm:$0xff] %v277
  $region21: #{_forward.4} parent=0 // pred_fallthru
    _
  // Predicated region
  $region22: #{_forward.4} parent=0 // pred_check
    _
  $region23: #{_forward.4} parent=0 // pred_check_branch
    %292 = sbr.rel (0) target = $region25
  $region24: #{_forward.4} parent=0 // pred_region
    _
  $region25: #{_forward.4} parent=0 // pred_fallthru
    _
  // Predicated region
  $region26: #{_forward.4} parent=0 // pred_check
    _
  $region27: #{_forward.4} parent=0 // pred_check_branch
    %294 = sbr.rel (0) target = $region29
  $region28: #{_forward.4} parent=0 // pred_region
    _
  $region29: #{_forward.4} parent=0 // pred_fallthru
    _

// kernel: _forward.5
$region0: #{_forward.5}
  #allocation0 [shape = 'u32[]', space=smem, size = 0x4, offset = 0x4, fixed_abs, tag = 'smem constant byte address 0x4 - core index']
  #allocation1 [shape = 'u32[144,128]{1,0:T(1,128)}', space=vmem, size = 0x12000, scoped, tag = 'internal scratch']
  #allocation2 [shape = 'f32[24,128]{1,0:T(8,128)}', space=vmem, size = 0x3000, scoped, tag = 'scratch operand']
  %s0 = inlined_call_operand.vmem [shape: f32[24,128], index: 0, kind: input, shape index: {}]
  %s1 = inlined_call_operand.vmem [shape: f32[128,128], index: 1, kind: input, shape index: {}]
  %s2 = inlined_call_operand.vmem [shape: f32[1,128], index: 2, kind: input, shape index: {}]
  %s3 = inlined_call_operand.vmem [shape: f32[24,128], index: 3, kind: output, shape index: {}]
  %s4 = sld [smem:[#allocation0]]
  $region30: #{_forward.5} parent=0
    _
  %s6 = ssub.s32 1, %s4
  %s7 = scalar_select 0, %s6, %s4
  // Predicated region
  $region2: #{_forward.5} parent=0 // pred_check
    _
  $region3: #{_forward.5} parent=0 // pred_check_branch
    %9 = sbr.rel (0) target = $region5
  $region4: #{_forward.5} parent=0 // pred_region
    _
  $region5: #{_forward.5} parent=0 // pred_fallthru
    _
  // Predicated region
  $region6: #{_forward.5} parent=0 // pred_check
    _
  $region7: #{_forward.5} parent=0 // pred_check_branch
    %11 = sbr.rel (0) target = $region9
  $region8: #{_forward.5} parent=0 // pred_region
    _
  $region9: #{_forward.5} parent=0 // pred_fallthru
    _
  // Predicated region
  $region10: #{_forward.5} parent=0 // pred_check
    _
  $region11: #{_forward.5} parent=0 // pred_check_branch
    %13 = sbr.rel (0) target = $region13
  $region12: #{_forward.5} parent=0 // pred_region
    _
  $region13: #{_forward.5} parent=0 // pred_fallthru
    _
  %p14 = scmp.eq.s32.totalorder 0, 0
  // Predicated region
  $region14: #{_forward.5} parent=0 // pred_check
    %p15 = pneg %p14
  $region15: #{_forward.5} parent=0 // pred_check_branch
    %17 = sbr.rel (%p15) target = $region17
  $region16: #{_forward.5} parent=0 // pred_region
    %18 = vst [vmem:[#allocation2] sm:$0xff] 0.0
    %19 = vst [vmem:[#allocation2 + $0x8] sm:$0xff] 0.0
    %20 = vst [vmem:[#allocation2 + $0x10] sm:$0xff] 0.0
  $region17: #{_forward.5} parent=0 // pred_fallthru
    _
  %v21 = vld [vmem:[#allocation2] sm:$0xff]
  %v22 = vld [vmem:[#allocation2 + $0x8] sm:$0xff]
  %v23 = vld [vmem:[#allocation2 + $0x10] sm:$0xff]
  %v24 = vld [vmem:[%s0] sm:$0xff]
  %v25 = vld [vmem:[%s0 + $0x8] sm:$0xff]
  %v26 = vld [vmem:[%s0 + $0x10] sm:$0xff]
  %v27 = vld [vmem:[%s1] sm:$0xff]
  %v28 = vld [vmem:[%s1 + $0x8] sm:$0xff]
  %v29 = vld [vmem:[%s1 + $0x10] sm:$0xff]
  %v30 = vld [vmem:[%s1 + $0x18] sm:$0xff]
  %v31 = vld [vmem:[%s1 + $0x20] sm:$0xff]
  %v32 = vld [vmem:[%s1 + $0x28] sm:$0xff]
  %v33 = vld [vmem:[%s1 + $0x30] sm:$0xff]
  %v34 = vld [vmem:[%s1 + $0x38] sm:$0xff]
  %v35 = vld [vmem:[%s1 + $0x40] sm:$0xff]
  %v36 = vld [vmem:[%s1 + $0x48] sm:$0xff]
  %v37 = vld [vmem:[%s1 + $0x50] sm:$0xff]
  %v38 = vld [vmem:[%s1 + $0x58] sm:$0xff]
  %v39 = vld [vmem:[%s1 + $0x60] sm:$0xff]
  %v40 = vld [vmem:[%s1 + $0x68] sm:$0xff]
  %v41 = vld [vmem:[%s1 + $0x70] sm:$0xff]
  %v42 = vld [vmem:[%s1 + $0x78] sm:$0xff]
  %43 = vmatprep.subr.mxu0 0.0
  %44 = vmatpush1.msra.mxu0 %v27
  %45 = vmatprep.subr.mxu0 0.0
  %46 = vmatpush1.msra.mxu0 %v28
  %47 = vmatprep.subr.mxu0 0.0
  %48 = vmatpush1.msra.mxu0 %v29
  %49 = vmatprep.subr.mxu0 0.0
  %50 = vmatpush1.msra.mxu0 %v30
  %51 = vmatprep.subr.mxu0 0.0
  %52 = vmatpush1.msra.mxu0 %v31
  %53 = vmatprep.subr.mxu0 0.0
  %54 = vmatpush1.msra.mxu0 %v32
  %55 = vmatprep.subr.mxu0 0.0
  %56 = vmatpush1.msra.mxu0 %v33
  %57 = vmatprep.subr.mxu0 0.0
  %58 = vmatpush1.msra.mxu0 %v34
  %59 = vmatprep.subr.mxu0 0.0
  %60 = vmatpush1.msra.mxu0 %v35
  %61 = vmatprep.subr.mxu0 0.0
  %62 = vmatpush1.msra.mxu0 %v36
  %63 = vmatprep.subr.mxu0 0.0
  %64 = vmatpush1.msra.mxu0 %v37
  %65 = vmatprep.subr.mxu0 0.0
  %66 = vmatpush1.msra.mxu0 %v38
  %67 = vmatprep.subr.mxu0 0.0
  %68 = vmatpush1.msra.mxu0 %v39
  %69 = vmatprep.subr.mxu0 0.0
  %70 = vmatpush1.msra.mxu0 %v40
  %71 = vmatprep.subr.mxu0 0.0
  %72 = vmatpush1.msra.mxu0 %v41
  %73 = vmatprep.subr.mxu0 0.0
  %74 = vmatpush1.msra.mxu0 %v42
  %75 = vmatprep.subr.mxu0 0.0
  %76 = vmatpush1.msra.mxu0 0.0
  %77 = vmatprep.subr.mxu0 0.0
  %78 = vmatpush1.msra.mxu0 0.0
  %79 = vmatprep.subr.mxu0 0.0
  %80 = vmatpush1.msra.mxu0 0.0
  %81 = vmatprep.subr.mxu0 0.0
  %82 = vmatpush1.msra.mxu0 0.0
  %83 = vmatprep.subr.mxu0 0.0
  %84 = vmatpush1.msra.mxu0 0.0
  %85 = vmatprep.subr.mxu0 0.0
  %86 = vmatpush1.msra.mxu0 0.0
  %87 = vmatprep.subr.mxu0 0.0
  %88 = vmatpush1.msra.mxu0 0.0
  %89 = vmatprep.subr.mxu0 0.0
  %90 = vmatpush1.msra.mxu0 0.0
  %91 = vmatprep.subr.mxu0 0.0
  %92 = vmatpush1.msra.mxu0 0.0
  %93 = vmatprep.subr.mxu0 0.0
  %94 = vmatpush1.msra.mxu0 0.0
  %95 = vmatprep.subr.mxu0 0.0
  %96 = vmatpush1.msra.mxu0 0.0
  %97 = vmatprep.subr.mxu0 0.0
  %98 = vmatpush1.msra.mxu0 0.0
  %99 = vmatprep.subr.mxu0 0.0
  %100 = vmatpush1.msra.mxu0 0.0
  %101 = vmatprep.subr.mxu0 0.0
  %102 = vmatpush1.msra.mxu0 0.0
  %103 = vmatprep.subr.mxu0 0.0
  %104 = vmatpush1.msra.mxu0 0.0
  %105 = vmatprep.subr.mxu0 0.0
  %106 = vmatpush1.msra.mxu0 0.0
  %107 = vmatprep.mubr.f32.mxu0 0.0
  %108 = vmatmul.mubr.f32.gmra.mrb[0].mxu0 %v24
  %v109 = vpop.f32.mrb[0].mxu0
  %v110 = vadd.f32 0.0, %v109
  %v111 = vpop.f32.mrb[0].mxu0
  %112 = vmatprep.mubr.f32.mxu0 0.0
  %113 = vmatmul.mubr.f32.gmra.mrb[0].mxu0 %v25
  %v114 = vpop.f32.mrb[0].mxu0
  %v115 = vadd.f32 0.0, %v114
  %v116 = vpop.f32.mrb[0].mxu0
  %117 = vmatprep.mubr.f32.mxu0 0.0
  %118 = vmatmul.mubr.f32.gmra.mrb[0].mxu0 %v26
  %v119 = vpop.f32.mrb[0].mxu0
  %v120 = vadd.f32 0.0, %v119
  %v121 = vpop.f32.mrb[0].mxu0
  %122 = vdwg.mxu0
  %v123 = vadd.f32 %v21, %v110
  %v124 = vadd.f32 %v22, %v115
  %v125 = vadd.f32 %v23, %v120
  %126 = vst [vmem:[#allocation2] sm:$0xff] %v123
  %127 = vst [vmem:[#allocation2 + $0x8] sm:$0xff] %v124
  %128 = vst [vmem:[#allocation2 + $0x10] sm:$0xff] %v125
  // Predicated region
  $region18: #{_forward.5} parent=0 // pred_check
    %p129 = pneg %p14
  $region19: #{_forward.5} parent=0 // pred_check_branch
    %131 = sbr.rel (%p129) target = $region21
  $region20: #{_forward.5} parent=0 // pred_region
    %v132 = vld [vmem:[#allocation2] sm:$0xff]
    %v133 = vld [vmem:[#allocation2 + $0x8] sm:$0xff]
    %v134 = vld [vmem:[#allocation2 + $0x10] sm:$0xff]
    %v135 = vld [vmem:[%s2] sm:$0x1]
    %v137 = vlaneseq
    %v138 = vshrl.u32 %v137, 7
    %v139 = vsub.s32 0, %v138
    %v140 = vrot.slane %v135, %v139
    %v142 = vadd.f32 %v132, %v140
    %v143 = vadd.f32 %v133, %v140
    %v144 = vadd.f32 %v134, %v140
    %v145 = vmax.f32 %v142, 0.0
    %v146 = vmax.f32 %v143, 0.0
    %v147 = vmax.f32 %v144, 0.0
    %148 = vst [vmem:[%s3] sm:$0xff] %v145
    %149 = vst [vmem:[%s3 + $0x8] sm:$0xff] %v146
    %150 = vst [vmem:[%s3 + $0x10] sm:$0xff] %v147
  $region21: #{_forward.5} parent=0 // pred_fallthru
    _
  // Predicated region
  $region22: #{_forward.5} parent=0 // pred_check
    _
  $region23: #{_forward.5} parent=0 // pred_check_branch
    %152 = sbr.rel (0) target = $region25
  $region24: #{_forward.5} parent=0 // pred_region
    _
  $region25: #{_forward.5} parent=0 // pred_fallthru
    _
  // Predicated region
  $region26: #{_forward.5} parent=0 // pred_check
    _
  $region27: #{_forward.5} parent=0 // pred_check_branch
    %154 = sbr.rel (0) target = $region29
  $region28: #{_forward.5} parent=0 // pred_region
    _
  $region29: #{_forward.5} parent=0 // pred_fallthru
    _

// kernel: _forward.6
$region0: #{_forward.6}
  #allocation0 [shape = 'u32[]', space=smem, size = 0x4, offset = 0x4, fixed_abs, tag = 'smem constant byte address 0x4 - core index']
  #allocation1 [shape = 'u32[144,128]{1,0:T(1,128)}', space=vmem, size = 0x12000, scoped, tag = 'internal scratch']
  #allocation2 [shape = 'f32[8,128]{1,0:T(8,128)}', space=vmem, size = 0x1000, scoped, tag = 'scratch operand']
  %s0 = inlined_call_operand.vmem [shape: f32[8,256], index: 0, kind: input, shape index: {}]
  %s1 = inlined_call_operand.vmem [shape: f32[256,128], index: 1, kind: input, shape index: {}]
  %s2 = inlined_call_operand.vmem [shape: f32[1,128], index: 2, kind: input, shape index: {}]
  %s3 = inlined_call_operand.vmem [shape: f32[8,128], index: 3, kind: output, shape index: {}]
  %s4 = sld [smem:[#allocation0]]
  $region30: #{_forward.6} parent=0
    _
  %s6 = ssub.s32 1, %s4
  %s7 = scalar_select 0, %s6, %s4
  // Predicated region
  $region2: #{_forward.6} parent=0 // pred_check
    _
  $region3: #{_forward.6} parent=0 // pred_check_branch
    %9 = sbr.rel (0) target = $region5
  $region4: #{_forward.6} parent=0 // pred_region
    _
  $region5: #{_forward.6} parent=0 // pred_fallthru
    _
  // Predicated region
  $region6: #{_forward.6} parent=0 // pred_check
    _
  $region7: #{_forward.6} parent=0 // pred_check_branch
    %11 = sbr.rel (0) target = $region9
  $region8: #{_forward.6} parent=0 // pred_region
    _
  $region9: #{_forward.6} parent=0 // pred_fallthru
    _
  // Predicated region
  $region10: #{_forward.6} parent=0 // pred_check
    _
  $region11: #{_forward.6} parent=0 // pred_check_branch
    %13 = sbr.rel (0) target = $region13
  $region12: #{_forward.6} parent=0 // pred_region
    _
  $region13: #{_forward.6} parent=0 // pred_fallthru
    _
  %p14 = scmp.eq.s32.totalorder 0, 0
  // Predicated region
  $region14: #{_forward.6} parent=0 // pred_check
    %p15 = pneg %p14
  $region15: #{_forward.6} parent=0 // pred_check_branch
    %17 = sbr.rel (%p15) target = $region17
  $region16: #{_forward.6} parent=0 // pred_region
    %18 = vst [vmem:[#allocation2] sm:$0xff] 0.0
  $region17: #{_forward.6} parent=0 // pred_fallthru
    _
  %v19 = vld [vmem:[#allocation2] sm:$0xff]
  %v20 = vld [vmem:[%s0] sm:$0xff]
  %v21 = vld [vmem:[%s0 + $0x8] sm:$0xff]
  %v22 = vld [vmem:[%s1] sm:$0xff]
  %v23 = vld [vmem:[%s1 + $0x8] sm:$0xff]
  %v24 = vld [vmem:[%s1 + $0x10] sm:$0xff]
  %v25 = vld [vmem:[%s1 + $0x18] sm:$0xff]
  %v26 = vld [vmem:[%s1 + $0x20] sm:$0xff]
  %v27 = vld [vmem:[%s1 + $0x28] sm:$0xff]
  %v28 = vld [vmem:[%s1 + $0x30] sm:$0xff]
  %v29 = vld [vmem:[%s1 + $0x38] sm:$0xff]
  %v30 = vld [vmem:[%s1 + $0x40] sm:$0xff]
  %v31 = vld [vmem:[%s1 + $0x48] sm:$0xff]
  %v32 = vld [vmem:[%s1 + $0x50] sm:$0xff]
  %v33 = vld [vmem:[%s1 + $0x58] sm:$0xff]
  %v34 = vld [vmem:[%s1 + $0x60] sm:$0xff]
  %v35 = vld [vmem:[%s1 + $0x68] sm:$0xff]
  %v36 = vld [vmem:[%s1 + $0x70] sm:$0xff]
  %v37 = vld [vmem:[%s1 + $0x78] sm:$0xff]
  %v38 = vld [vmem:[%s1 + $0x80] sm:$0xff]
  %v39 = vld [vmem:[%s1 + $0x88] sm:$0xff]
  %v40 = vld [vmem:[%s1 + $0x90] sm:$0xff]
  %v41 = vld [vmem:[%s1 + $0x98] sm:$0xff]
  %v42 = vld [vmem:[%s1 + $0xa0] sm:$0xff]
  %v43 = vld [vmem:[%s1 + $0xa8] sm:$0xff]
  %v44 = vld [vmem:[%s1 + $0xb0] sm:$0xff]
  %v45 = vld [vmem:[%s1 + $0xb8] sm:$0xff]
  %v46 = vld [vmem:[%s1 + $0xc0] sm:$0xff]
  %v47 = vld [vmem:[%s1 + $0xc8] sm:$0xff]
  %v48 = vld [vmem:[%s1 + $0xd0] sm:$0xff]
  %v49 = vld [vmem:[%s1 + $0xd8] sm:$0xff]
  %v50 = vld [vmem:[%s1 + $0xe0] sm:$0xff]
  %v51 = vld [vmem:[%s1 + $0xe8] sm:$0xff]
  %v52 = vld [vmem:[%s1 + $0xf0] sm:$0xff]
  %v53 = vld [vmem:[%s1 + $0xf8] sm:$0xff]
  %54 = vmatprep.subr.mxu0 0.0
  %55 = vmatpush1.msra.mxu0 %v22
  %56 = vmatprep.subr.mxu0 0.0
  %57 = vmatpush1.msra.mxu0 %v23
  %58 = vmatprep.subr.mxu0 0.0
  %59 = vmatpush1.msra.mxu0 %v24
  %60 = vmatprep.subr.mxu0 0.0
  %61 = vmatpush1.msra.mxu0 %v25
  %62 = vmatprep.subr.mxu0 0.0
  %63 = vmatpush1.msra.mxu0 %v26
  %64 = vmatprep.subr.mxu0 0.0
  %65 = vmatpush1.msra.mxu0 %v27
  %66 = vmatprep.subr.mxu0 0.0
  %67 = vmatpush1.msra.mxu0 %v28
  %68 = vmatprep.subr.mxu0 0.0
  %69 = vmatpush1.msra.mxu0 %v29
  %70 = vmatprep.subr.mxu0 0.0
  %71 = vmatpush1.msra.mxu0 %v30
  %72 = vmatprep.subr.mxu0 0.0
  %73 = vmatpush1.msra.mxu0 %v31
  %74 = vmatprep.subr.mxu0 0.0
  %75 = vmatpush1.msra.mxu0 %v32
  %76 = vmatprep.subr.mxu0 0.0
  %77 = vmatpush1.msra.mxu0 %v33
  %78 = vmatprep.subr.mxu0 0.0
  %79 = vmatpush1.msra.mxu0 %v34
  %80 = vmatprep.subr.mxu0 0.0
  %81 = vmatpush1.msra.mxu0 %v35
  %82 = vmatprep.subr.mxu0 0.0
  %83 = vmatpush1.msra.mxu0 %v36
  %84 = vmatprep.subr.mxu0 0.0
  %85 = vmatpush1.msra.mxu0 %v37
  %86 = vmatprep.subr.mxu0 0.0
  %87 = vmatpush1.msra.mxu0 %v38
  %88 = vmatprep.subr.mxu0 0.0
  %89 = vmatpush1.msra.mxu0 %v39
  %90 = vmatprep.subr.mxu0 0.0
  %91 = vmatpush1.msra.mxu0 %v40
  %92 = vmatprep.subr.mxu0 0.0
  %93 = vmatpush1.msra.mxu0 %v41
  %94 = vmatprep.subr.mxu0 0.0
  %95 = vmatpush1.msra.mxu0 %v42
  %96 = vmatprep.subr.mxu0 0.0
  %97 = vmatpush1.msra.mxu0 %v43
  %98 = vmatprep.subr.mxu0 0.0
  %99 = vmatpush1.msra.mxu0 %v44
  %100 = vmatprep.subr.mxu0 0.0
  %101 = vmatpush1.msra.mxu0 %v45
  %102 = vmatprep.subr.mxu0 0.0
  %103 = vmatpush1.msra.mxu0 %v46
  %104 = vmatprep.subr.mxu0 0.0
  %105 = vmatpush1.msra.mxu0 %v47
  %106 = vmatprep.subr.mxu0 0.0
  %107 = vmatpush1.msra.mxu0 %v48
  %108 = vmatprep.subr.mxu0 0.0
  %109 = vmatpush1.msra.mxu0 %v49
  %110 = vmatprep.subr.mxu0 0.0
  %111 = vmatpush1.msra.mxu0 %v50
  %112 = vmatprep.subr.mxu0 0.0
  %113 = vmatpush1.msra.mxu0 %v51
  %114 = vmatprep.subr.mxu0 0.0
  %115 = vmatpush1.msra.mxu0 %v52
  %116 = vmatprep.subr.mxu0 0.0
  %117 = vmatpush1.msra.mxu0 %v53
  %118 = vmatprep.mubr.f32.mxu0 %v21
  %119 = vmatmul.mubr.f32.gmra.mrb[0].mxu0 %v20
  %v120 = vpop.f32.mrb[0].mxu0
  %v121 = vadd.f32 0.0, %v120
  %v122 = vpop.f32.mrb[0].mxu0
  %123 = vdwg.mxu0
  %v124 = vadd.f32 %v19, %v121
  %125 = vst [vmem:[#allocation2] sm:$0xff] %v124
  // Predicated region
  $region18: #{_forward.6} parent=0 // pred_check
    %p126 = pneg %p14
  $region19: #{_forward.6} parent=0 // pred_check_branch
    %128 = sbr.rel (%p126) target = $region21
  $region20: #{_forward.6} parent=0 // pred_region
    %v129 = vld [vmem:[#allocation2] sm:$0xff]
    %v130 = vld [vmem:[%s2] sm:$0x1]
    %v132 = vlaneseq
    %v133 = vshrl.u32 %v132, 7
    %v134 = vsub.s32 0, %v133
    %v135 = vrot.slane %v130, %v134
    %v137 = vadd.f32 %v129, %v135
    %v138 = vmax.f32 %v137, 0.0
    %139 = vst [vmem:[%s3] sm:$0xff] %v138
  $region21: #{_forward.6} parent=0 // pred_fallthru
    _
  // Predicated region
  $region22: #{_forward.6} parent=0 // pred_check
    _
  $region23: #{_forward.6} parent=0 // pred_check_branch
    %141 = sbr.rel (0) target = $region25
  $region24: #{_forward.6} parent=0 // pred_region
    _
  $region25: #{_forward.6} parent=0 // pred_fallthru
    _
  // Predicated region
  $region26: #{_forward.6} parent=0 // pred_check
    _
  $region27: #{_forward.6} parent=0 // pred_check_branch
    %143 = sbr.rel (0) target = $region29
  $region28: #{_forward.6} parent=0 // pred_region
    _
  $region29: #{_forward.6} parent=0 // pred_fallthru
    _

// kernel: _forward.7
$region0: #{_forward.7}
  #allocation0 [shape = 'u32[]', space=smem, size = 0x4, offset = 0x4, fixed_abs, tag = 'smem constant byte address 0x4 - core index']
  #allocation1 [shape = 'u32[144,128]{1,0:T(1,128)}', space=vmem, size = 0x12000, scoped, tag = 'internal scratch']
  #allocation2 [shape = 'f32[8,128]{1,0:T(8,128)}', space=vmem, size = 0x1000, scoped, tag = 'scratch operand']
  %s0 = inlined_call_operand.vmem [shape: f32[8,128], index: 0, kind: input, shape index: {}]
  %s1 = inlined_call_operand.vmem [shape: f32[128,128], index: 1, kind: input, shape index: {}]
  %s2 = inlined_call_operand.vmem [shape: f32[1,128], index: 2, kind: input, shape index: {}]
  %s3 = inlined_call_operand.vmem [shape: f32[8,128], index: 3, kind: output, shape index: {}]
  %s4 = sld [smem:[#allocation0]]
  $region30: #{_forward.7} parent=0
    _
  %s6 = ssub.s32 1, %s4
  %s7 = scalar_select 0, %s6, %s4
  // Predicated region
  $region2: #{_forward.7} parent=0 // pred_check
    _
  $region3: #{_forward.7} parent=0 // pred_check_branch
    %9 = sbr.rel (0) target = $region5
  $region4: #{_forward.7} parent=0 // pred_region
    _
  $region5: #{_forward.7} parent=0 // pred_fallthru
    _
  // Predicated region
  $region6: #{_forward.7} parent=0 // pred_check
    _
  $region7: #{_forward.7} parent=0 // pred_check_branch
    %11 = sbr.rel (0) target = $region9
  $region8: #{_forward.7} parent=0 // pred_region
    _
  $region9: #{_forward.7} parent=0 // pred_fallthru
    _
  // Predicated region
  $region10: #{_forward.7} parent=0 // pred_check
    _
  $region11: #{_forward.7} parent=0 // pred_check_branch
    %13 = sbr.rel (0) target = $region13
  $region12: #{_forward.7} parent=0 // pred_region
    _
  $region13: #{_forward.7} parent=0 // pred_fallthru
    _
  %p14 = scmp.eq.s32.totalorder 0, 0
  // Predicated region
  $region14: #{_forward.7} parent=0 // pred_check
    %p15 = pneg %p14
  $region15: #{_forward.7} parent=0 // pred_check_branch
    %17 = sbr.rel (%p15) target = $region17
  $region16: #{_forward.7} parent=0 // pred_region
    %18 = vst [vmem:[#allocation2] sm:$0xff] 0.0
  $region17: #{_forward.7} parent=0 // pred_fallthru
    _
  %v19 = vld [vmem:[#allocation2] sm:$0xff]
  %v20 = vld [vmem:[%s0] sm:$0xff]
  %v21 = vld [vmem:[%s1] sm:$0xff]
  %v22 = vld [vmem:[%s1 + $0x8] sm:$0xff]
  %v23 = vld [vmem:[%s1 + $0x10] sm:$0xff]
  %v24 = vld [vmem:[%s1 + $0x18] sm:$0xff]
  %v25 = vld [vmem:[%s1 + $0x20] sm:$0xff]
  %v26 = vld [vmem:[%s1 + $0x28] sm:$0xff]
  %v27 = vld [vmem:[%s1 + $0x30] sm:$0xff]
  %v28 = vld [vmem:[%s1 + $0x38] sm:$0xff]
  %v29 = vld [vmem:[%s1 + $0x40] sm:$0xff]
  %v30 = vld [vmem:[%s1 + $0x48] sm:$0xff]
  %v31 = vld [vmem:[%s1 + $0x50] sm:$0xff]
  %v32 = vld [vmem:[%s1 + $0x58] sm:$0xff]
  %v33 = vld [vmem:[%s1 + $0x60] sm:$0xff]
  %v34 = vld [vmem:[%s1 + $0x68] sm:$0xff]
  %v35 = vld [vmem:[%s1 + $0x70] sm:$0xff]
  %v36 = vld [vmem:[%s1 + $0x78] sm:$0xff]
  %37 = vmatprep.subr.mxu0 0.0
  %38 = vmatpush1.msra.mxu0 %v21
  %39 = vmatprep.subr.mxu0 0.0
  %40 = vmatpush1.msra.mxu0 %v22
  %41 = vmatprep.subr.mxu0 0.0
  %42 = vmatpush1.msra.mxu0 %v23
  %43 = vmatprep.subr.mxu0 0.0
  %44 = vmatpush1.msra.mxu0 %v24
  %45 = vmatprep.subr.mxu0 0.0
  %46 = vmatpush1.msra.mxu0 %v25
  %47 = vmatprep.subr.mxu0 0.0
  %48 = vmatpush1.msra.mxu0 %v26
  %49 = vmatprep.subr.mxu0 0.0
  %50 = vmatpush1.msra.mxu0 %v27
  %51 = vmatprep.subr.mxu0 0.0
  %52 = vmatpush1.msra.mxu0 %v28
  %53 = vmatprep.subr.mxu0 0.0
  %54 = vmatpush1.msra.mxu0 %v29
  %55 = vmatprep.subr.mxu0 0.0
  %56 = vmatpush1.msra.mxu0 %v30
  %57 = vmatprep.subr.mxu0 0.0
  %58 = vmatpush1.msra.mxu0 %v31
  %59 = vmatprep.subr.mxu0 0.0
  %60 = vmatpush1.msra.mxu0 %v32
  %61 = vmatprep.subr.mxu0 0.0
  %62 = vmatpush1.msra.mxu0 %v33
  %63 = vmatprep.subr.mxu0 0.0
  %64 = vmatpush1.msra.mxu0 %v34
  %65 = vmatprep.subr.mxu0 0.0
  %66 = vmatpush1.msra.mxu0 %v35
  %67 = vmatprep.subr.mxu0 0.0
  %68 = vmatpush1.msra.mxu0 %v36
  %69 = vmatprep.subr.mxu0 0.0
  %70 = vmatpush1.msra.mxu0 0.0
  %71 = vmatprep.subr.mxu0 0.0
  %72 = vmatpush1.msra.mxu0 0.0
  %73 = vmatprep.subr.mxu0 0.0
  %74 = vmatpush1.msra.mxu0 0.0
  %75 = vmatprep.subr.mxu0 0.0
  %76 = vmatpush1.msra.mxu0 0.0
  %77 = vmatprep.subr.mxu0 0.0
  %78 = vmatpush1.msra.mxu0 0.0
  %79 = vmatprep.subr.mxu0 0.0
  %80 = vmatpush1.msra.mxu0 0.0
  %81 = vmatprep.subr.mxu0 0.0
  %82 = vmatpush1.msra.mxu0 0.0
  %83 = vmatprep.subr.mxu0 0.0
  %84 = vmatpush1.msra.mxu0 0.0
  %85 = vmatprep.subr.mxu0 0.0
  %86 = vmatpush1.msra.mxu0 0.0
  %87 = vmatprep.subr.mxu0 0.0
  %88 = vmatpush1.msra.mxu0 0.0
  %89 = vmatprep.subr.mxu0 0.0
  %90 = vmatpush1.msra.mxu0 0.0
  %91 = vmatprep.subr.mxu0 0.0
  %92 = vmatpush1.msra.mxu0 0.0
  %93 = vmatprep.subr.mxu0 0.0
  %94 = vmatpush1.msra.mxu0 0.0
  %95 = vmatprep.subr.mxu0 0.0
  %96 = vmatpush1.msra.mxu0 0.0
  %97 = vmatprep.subr.mxu0 0.0
  %98 = vmatpush1.msra.mxu0 0.0
  %99 = vmatprep.subr.mxu0 0.0
  %100 = vmatpush1.msra.mxu0 0.0
  %101 = vmatprep.mubr.f32.mxu0 0.0
  %102 = vmatmul.mubr.f32.gmra.mrb[0].mxu0 %v20
  %v103 = vpop.f32.mrb[0].mxu0
  %v104 = vadd.f32 0.0, %v103
  %v105 = vpop.f32.mrb[0].mxu0
  %106 = vdwg.mxu0
  %v107 = vadd.f32 %v19, %v104
  %108 = vst [vmem:[#allocation2] sm:$0xff] %v107
  // Predicated region
  $region18: #{_forward.7} parent=0 // pred_check
    %p109 = pneg %p14
  $region19: #{_forward.7} parent=0 // pred_check_branch
    %111 = sbr.rel (%p109) target = $region21
  $region20: #{_forward.7} parent=0 // pred_region
    %v112 = vld [vmem:[#allocation2] sm:$0xff]
    %v113 = vld [vmem:[%s2] sm:$0x1]
    %v115 = vlaneseq
    %v116 = vshrl.u32 %v115, 7
    %v117 = vsub.s32 0, %v116
    %v118 = vrot.slane %v113, %v117
    %v120 = vadd.f32 %v112, %v118
    %v121 = vmax.f32 %v120, 0.0
    %122 = vst [vmem:[%s3] sm:$0xff] %v121
  $region21: #{_forward.7} parent=0 // pred_fallthru
    _
  // Predicated region
  $region22: #{_forward.7} parent=0 // pred_check
    _
  $region23: #{_forward.7} parent=0 // pred_check_branch
    %124 = sbr.rel (0) target = $region25
  $region24: #{_forward.7} parent=0 // pred_region
    _
  $region25: #{_forward.7} parent=0 // pred_fallthru
    _
  // Predicated region
  $region26: #{_forward.7} parent=0 // pred_check
    _
  $region27: #{_forward.7} parent=0 // pred_check_branch
    %126 = sbr.rel (0) target = $region29
  $region28: #{_forward.7} parent=0 // pred_region
    _
  $region29: #{_forward.7} parent=0 // pred_fallthru
    _

</llo_original>
